<compile_context>
chip_gen: v6e
topology: v6e:2x2x1
jax: 0.10.0
libtpu: 0.0.40
codegen_flags: <defaults>
</compile_context>

<pallas_src>
import math

import jax
import jax.numpy as jnp
from jax.experimental import pallas as pl
from jax.experimental.pallas import tpu as pltpu


def _round_up(x, m):
    return ((x + m - 1) // m) * m


# -----------------------------------------------------------------------------
# Kernels
# -----------------------------------------------------------------------------
def _rnn_cell_kernel_fullk(xh_ref, w_ref, bias_ref, out_ref):
    """Single-shot tile: whole contraction fits one block (typical RNN cell).

    xh_ref:   (TM, K)  bf16  -- [x | hx] tile
    w_ref:    (K,  TN) bf16  -- stacked [sign(W_ih).T ; W_hh.T] column tile
    bias_ref: (1,  TN) f32   -- fused bias (b_ih + b_hh)
    out_ref:  (TM, TN) f32
    """
    out_ref[...] = jnp.tanh(
        jnp.dot(xh_ref[...], w_ref[...], preferred_element_type=jnp.float32)
        + bias_ref[...]
    ).astype(out_ref.dtype)


def _rnn_cell_kernel_ktiled(xh_ref, w_ref, bias_ref, out_ref):
    """K-tiled fallback for very large I+H.

    Accumulates directly into the (K-resident, f32) output block -- no separate
    VMEM accumulator scratch, no zero-fill store, no acc->out copy.
    """
    k = pl.program_id(2)
    partial = jnp.dot(xh_ref[...], w_ref[...], preferred_element_type=jnp.float32)

    @pl.when(k == 0)
    def _():
        out_ref[...] = partial

    @pl.when(k != 0)
    def _():
        out_ref[...] = out_ref[...] + partial

    @pl.when(k == pl.num_programs(2) - 1)
    def _():
        out_ref[...] = jnp.tanh(out_ref[...] + bias_ref[...])


# -----------------------------------------------------------------------------
# One-time parameter preparation (layout plumbing, NOT per-step compute)
# -----------------------------------------------------------------------------
def prepare_rnn_cell_params(weight_ih, weight_hh, bias_ih, bias_hh, *, tn=None, tk=None):
    """Binarize W_ih, pre-transpose, K-stack with W_hh, fuse biases, pad.

    Call this once per sequence / forward; reuse the result for every timestep.
    """
    hidden_size, input_size = weight_ih.shape
    k_dim = input_size + hidden_size

    # Binarize (sign(0) -> +1), pre-transpose, and stack both weight matrices
    # along the contraction axis so the kernel is a single matmul in MXU-native
    # orientation (no in-kernel .T).
    wih_bin_t = jnp.where(weight_ih >= 0, 1.0, -1.0).astype(jnp.float32).T      # (I, H)
    w_stack = jnp.concatenate(
        [wih_bin_t, weight_hh.astype(jnp.float32).T], axis=0)                    # (I+H, H)
    bias = (bias_ih + bias_hh).astype(jnp.float32).reshape(1, hidden_size)       # (1, H)

    # Minimum lane-aligned sizes.
    h_min = _round_up(hidden_size, 128)
    k_min = _round_up(k_dim, 128)

    # Tile selection: big tiles (this kernel is weight-DMA bound, VMEM is ~empty).
    if tn is None:
        tn = min(h_min, 512)
        # Keep >= 2 output column tiles so v7x's two TensorCores both get work.
        if h_min >= 256:
            tn = min(tn, max(128, (h_min // 2 // 128) * 128))
    if tk is None:
        # Prefer full-K so the reduction grid axis collapses entirely.
        tk = min(k_min, 2048)

    # Pad UP TO MULTIPLES OF THE CHOSEN TILES (no dropped tail blocks).
    h_pad = _round_up(h_min, tn)
    k_pad = _round_up(k_min, tk)

    w_p = jnp.pad(
        w_stack.astype(jnp.bfloat16),
        ((0, k_pad - k_dim), (0, h_pad - hidden_size)),
    )
    bias_p = jnp.pad(bias, ((0, 0), (0, h_pad - hidden_size)))

    # TODO(synk): when I >= ~H, carry the sign(W_ih) half as int8 (v5e/v6e MXU)
    # or fp8-e4m3 (v7x MXU, no int path) in a split contraction to halve the
    # binarized-weight HBM stream.
    return dict(
        input_size=input_size, hidden_size=hidden_size, k_dim=k_dim,
        h_pad=h_pad, k_pad=k_pad, tn=tn, tk=tk, w=w_p, bias=bias_p,
    )


# -----------------------------------------------------------------------------
# Forward
# -----------------------------------------------------------------------------
def rnn_cell_apply(x, hx, params, *, tm=None):
    """One RNNCell step using pre-prepared (padded/stacked) parameters."""
    batch = x.shape[0]
    hidden_size = params["hidden_size"]
    k_dim, h_pad, k_pad = params["k_dim"], params["h_pad"], params["k_pad"]
    tn, tk = params["tn"], params["tk"]
    w_p, bias_p = params["w"], params["bias"]

    # Row tile: multiple of 16 (bf16 sublane packing), capped, then pad batch
    # up to a multiple of the chosen tile.
    if tm is None:
        tm = min(_round_up(batch, 16), 512)
    b_pad = _round_up(_round_up(batch, 16), tm)

    xh = jnp.concatenate([x.astype(jnp.bfloat16), hx.astype(jnp.bfloat16)], axis=1)
    xh_p = jnp.pad(xh, ((0, b_pad - batch), (0, k_pad - k_dim)))

    ni, nj, nk = b_pad // tm, h_pad // tn, k_pad // tk

    flops = 2 * b_pad * h_pad * k_pad
    bytes_accessed = (
        xh_p.size * 2 + w_p.size * 2 + bias_p.size * 4 + b_pad * h_pad * 4
    )
    cost = pl.CostEstimate(
        flops=flops, transcendentals=b_pad * h_pad, bytes_accessed=bytes_accessed
    )

    if nk == 1:
        # Reduction axis collapsed: 2-D (parallel, parallel) grid, no scratch,
        # no pl.when phases -- one matmul + bias + tanh per output tile.
        out_p = pl.pallas_call(
            _rnn_cell_kernel_fullk,
            out_shape=jax.ShapeDtypeStruct((b_pad, h_pad), jnp.float32),
            grid_spec=pltpu.PrefetchScalarGridSpec(
                num_scalar_prefetch=0,
                grid=(ni, nj),
                in_specs=[
                    pl.BlockSpec((tm, tk), lambda i, j: (i, 0)),
                    pl.BlockSpec((tk, tn), lambda i, j: (0, j)),
                    pl.BlockSpec((1, tn), lambda i, j: (0, j)),
                ],
                out_specs=pl.BlockSpec((tm, tn), lambda i, j: (i, j)),
            ),
            compiler_params=pltpu.CompilerParams(
                dimension_semantics=("parallel", "parallel"),
            ),
            cost_estimate=cost,
        )(xh_p, w_p, bias_p)
    else:
        # Huge I+H fallback: K axis last ("arbitrary"), accumulate into the
        # K-resident f32 output block.
        out_p = pl.pallas_call(
            _rnn_cell_kernel_ktiled,
            out_shape=jax.ShapeDtypeStruct((b_pad, h_pad), jnp.float32),
            grid_spec=pltpu.PrefetchScalarGridSpec(
                num_scalar_prefetch=0,
                grid=(ni, nj, nk),
                in_specs=[
                    pl.BlockSpec((tm, tk), lambda i, j, k: (i, k)),
                    pl.BlockSpec((tk, tn), lambda i, j, k: (k, j)),
                    pl.BlockSpec((1, tn), lambda i, j, k: (0, j)),
                ],
                out_specs=pl.BlockSpec((tm, tn), lambda i, j, k: (i, j)),
            ),
            compiler_params=pltpu.CompilerParams(
                dimension_semantics=("parallel", "parallel", "arbitrary"),
            ),
            cost_estimate=cost,
        )(xh_p, w_p, bias_p)

    # Strip padding.
    return out_p[:batch, :hidden_size]

    # TODO(synk): when driving this cell over a sequence, add a time grid axis
    # ("arbitrary") with constant weight index_maps and carry h in VMEM scratch
    # so the stacked weights stay HBM-read-once / VMEM-resident across steps
    # (budget ~48 MiB on v7x, ~100 MiB on v5e/v6e).


def rnn_cell_forward(x, hx, weight_ih, weight_hh, bias_ih, bias_hh):
    """Convenience one-shot wrapper (prepare + apply). For sequences, call
    prepare_rnn_cell_params once and rnn_cell_apply per step."""
    params = prepare_rnn_cell_params(weight_ih, weight_hh, bias_ih, bias_hh)
    return rnn_cell_apply(x, hx, params)


def reference_f32(x, hx, weight_ih, weight_hh, bias_ih, bias_hh):
    wih_bin = jnp.where(weight_ih >= 0, 1.0, -1.0)
    return jnp.tanh(x @ wih_bin.T + bias_ih + hx @ weight_hh.T + bias_hh)


if __name__ == "__main__":
    input_size = 16
    hidden_size = 32
    batch = 8

    key = jax.random.PRNGKey(0)
    k_x, k_h, k_wih, k_whh, k_bih, k_bhh = jax.random.split(key, 6)

    stdv = 1.0 / math.sqrt(hidden_size)
    weight_ih = jax.random.uniform(
        k_wih, (hidden_size, input_size), jnp.float32, -stdv, stdv
    )
    weight_hh = jax.random.uniform(
        k_whh, (hidden_size, hidden_size), jnp.float32, -stdv, stdv
    )
    bias_ih = jax.random.uniform(k_bih, (hidden_size,), jnp.float32, -stdv, stdv)
    bias_hh = jax.random.uniform(k_bhh, (hidden_size,), jnp.float32, -stdv, stdv)

    x = jax.random.normal(k_x, (batch, input_size), jnp.float32)
    hx = jax.random.normal(k_h, (batch, hidden_size), jnp.float32)

    out = rnn_cell_forward(x, hx, weight_ih, weight_hh, bias_ih, bias_hh)
    out = jax.block_until_ready(out)

    ref = reference_f32(x, hx, weight_ih, weight_hh, bias_ih, bias_hh)
    assert out.shape == (batch, hidden_size)
    # bf16 matmul operands (f32 accumulation): tolerance loosened accordingly.
    assert jnp.allclose(out, ref, atol=3e-2, rtol=1e-2), "mismatch vs reference"
    assert bool(jnp.all(jnp.isfinite(out)))

    print("KERNEL_OK")
</pallas_src>

<mosaic_0001>
module attributes {stable_mosaic.version = 11 : i64} {
  func.func @_rnn_cell_kernel_fullk(%arg0: i32, %arg1: i32, %arg2: memref<16x128xbf16, #tpu.memory_space<vmem>>, %arg3: memref<128x128xbf16, #tpu.memory_space<vmem>>, %arg4: memref<1x128xf32, #tpu.memory_space<vmem>>, %arg5: memref<16x128xf32, #tpu.memory_space<vmem>>) attributes {dimension_semantics = [#tpu.dimension_semantics<parallel>, #tpu.dimension_semantics<parallel>], iteration_bounds = array<i64: 1, 1>, scalar_prefetch = 0 : i64, scratch_operands = 0 : i64, tpu.core_type = #tpu.core_type<tc>, window_params = [{transform_indices = @transform_0, window_bounds = array<i64: 16, 128>}, {transform_indices = @transform_1, window_bounds = array<i64: 128, 128>}, {transform_indices = @transform_2, window_bounds = array<i64: 1, 128>}, {transform_indices = @transform_3, window_bounds = array<i64: 16, 128>}]} {
    %c0 = arith.constant 0 : index
    %c0_0 = arith.constant 0 : index
    %0 = vector.load %arg2[%c0, %c0_0] : memref<16x128xbf16, #tpu.memory_space<vmem>>, vector<16x128xbf16>
    %c0_1 = arith.constant 0 : index
    %c0_2 = arith.constant 0 : index
    %1 = vector.load %arg3[%c0_1, %c0_2] : memref<128x128xbf16, #tpu.memory_space<vmem>>, vector<128x128xbf16>
    %cst = arith.constant dense<0.000000e+00> : vector<16x128xf32>
    %2 = tpu.matmul %0, %1, %cst {dimension_numbers = #tpu.dot_dimension_numbers<[1], [0], [0], [1], [0, 0, 1, 1], [], []>} : vector<16x128xbf16>, vector<128x128xbf16>, vector<16x128xf32> -> vector<16x128xf32>
    %c0_3 = arith.constant 0 : index
    %c0_4 = arith.constant 0 : index
    %3 = vector.load %arg4[%c0_3, %c0_4] : memref<1x128xf32, #tpu.memory_space<vmem>>, vector<1x128xf32>
    %4 = vector.broadcast %3 : vector<1x128xf32> to vector<16x128xf32>
    %5 = arith.addf %2, %4 : vector<16x128xf32>
    %6 = math.tanh %5 : vector<16x128xf32>
    %c0_5 = arith.constant 0 : index
    %c0_6 = arith.constant 0 : index
    %7 = vector.load %arg5[%c0_5, %c0_6] : memref<16x128xf32, #tpu.memory_space<vmem>>, vector<16x128xf32>
    tpu.vector_store %arg5[%c0_5, %c0_6], %6 {strides = array<i32>} : memref<16x128xf32, #tpu.memory_space<vmem>>, vector<16x128xf32>,
    return
  }
  func.func @transform_0(%arg0: i32, %arg1: i32) -> (i32, i32) {
    %c0_i32 = arith.constant 0 : i32
    %c0_i32_0 = arith.constant 0 : i32
    return %arg0, %c0_i32 : i32, i32
  }
  func.func @transform_1(%arg0: i32, %arg1: i32) -> (i32, i32) {
    %c0_i32 = arith.constant 0 : i32
    %c0_i32_0 = arith.constant 0 : i32
    return %c0_i32, %arg1 : i32, i32
  }
  func.func @transform_2(%arg0: i32, %arg1: i32) -> (i32, i32) {
    %c0_i32 = arith.constant 0 : i32
    %c0_i32_0 = arith.constant 0 : i32
    return %c0_i32, %arg1 : i32, i32
  }
  func.func @transform_3(%arg0: i32, %arg1: i32) -> (i32, i32) {
    %c0_i32 = arith.constant 0 : i32
    return %arg0, %arg1 : i32, i32
  }
}

</mosaic_0001>

<llo_original>
// kernel: tpu_custom_call.1
$region0: #{tpu_custom_call.1}
  #allocation0 [shape = 'u32[]', space=smem, size = 0x4, offset = 0x4, fixed_abs, tag = 'smem constant byte address 0x4 - core index']
  #allocation1 [shape = 'u32[144,128]{1,0:T(1,128)}', space=vmem, size = 0x12000, scoped, tag = 'internal scratch']
  %s0 = inlined_call_operand.hbm [shape: bf16[16,128], index: 0, kind: input, shape index: {}]
  %s1 = inlined_call_operand.hbm [shape: bf16[128,128], index: 1, kind: input, shape index: {}]
  %s2 = inlined_call_operand.vmem [shape: f32[1,128], index: 2, kind: input, shape index: {}]
  %s3 = inlined_call_operand.hbm [shape: f32[16,128], index: 3, kind: output, shape index: {}]
  %s4 = sld [smem:[#allocation0]]
  $region30: #{tpu_custom_call.1} parent=0
    _
  %s6 = ssub.s32 1, %s4
  %s7 = scalar_select 0, %s6, %s4
  $region1: #{tpu_custom_call.1} parent=0
    #allocation2 [shape = 'u8[4096]{0}', space=vmem, size = 0x1000, scoped, tag = 'input window, operand 0, single buffered']
    #allocation3 [shape = 's32[1]{0}', space=sflag, size = 0x4, scoped, tag = 'scoped memory for tpu_custom_call.1']
    #allocation4 [shape = 's32[1]{0}', space=sflag, size = 0x4, scoped, tag = 'scoped memory for tpu_custom_call.1']
    #allocation5 [shape = 'u8[32768]{0}', space=vmem, size = 0x8000, scoped, tag = 'input window, operand 1, single buffered']
    #allocation6 [shape = 's32[1]{0}', space=sflag, size = 0x4, scoped, tag = 'scoped memory for tpu_custom_call.1']
    #allocation7 [shape = 'u8[8192]{0}', space=vmem, size = 0x2000, scoped, tag = 'output window, operand 0, single buffered']
    %8 = vsyncpa [#allocation3], 0
    %9 = vsyncpa [#allocation6], 0
    %10 = vsyncpa [#allocation4], 0
    // Predicated region
    $region2: #{tpu_custom_call.1} parent=1 // pred_check
      _
    $region3: #{tpu_custom_call.1} parent=1 // pred_check_branch
      %12 = sbr.rel (0) target = $region5
    $region4: #{tpu_custom_call.1} parent=1 // pred_region
      %s14 = ssub.s32 128, 128
      %15 = vsyncadd [#allocation3], %s14
      %s16 = sshll.u32 [#allocation2], 4
      %s17 = int_to_ptr.vmem [resolvable:$true] %s16
      %22 = dma.hbm_to_vmem [thread:$0]  %s0, 128, %s17, [#allocation3], 64, 64, 4
    $region5: #{tpu_custom_call.1} parent=1 // pred_fallthru
      _
    // Predicated region
    $region6: #{tpu_custom_call.1} parent=1 // pred_check
      _
    $region7: #{tpu_custom_call.1} parent=1 // pred_check_branch
      %24 = sbr.rel (0) target = $region9
    $region8: #{tpu_custom_call.1} parent=1 // pred_region
      %s26 = ssub.s32 1024, 1024
      %27 = vsyncadd [#allocation6], %s26
      %s28 = sshll.u32 [#allocation5], 4
      %s29 = int_to_ptr.vmem [resolvable:$true] %s28
      %34 = dma.hbm_to_vmem [thread:$0]  %s1, 1024, %s29, [#allocation6], 64, 64, 4
    $region9: #{tpu_custom_call.1} parent=1 // pred_fallthru
      _
    // Predicated region
    $region10: #{tpu_custom_call.1} parent=1 // pred_check
      _
    $region11: #{tpu_custom_call.1} parent=1 // pred_check_branch
      %36 = sbr.rel (0) target = $region13
    $region12: #{tpu_custom_call.1} parent=1 // pred_region
      _
    $region13: #{tpu_custom_call.1} parent=1 // pred_fallthru
      _
    // Predicated region
    $region14: #{tpu_custom_call.1} parent=1 // pred_check
      _
    $region15: #{tpu_custom_call.1} parent=1 // pred_check_branch
      %38 = sbr.rel (0) target = $region17
    $region16: #{tpu_custom_call.1} parent=1 // pred_region
      %39 = dma.done [#allocation3], 128
    $region17: #{tpu_custom_call.1} parent=1 // pred_fallthru
      _
    // Predicated region
    $region18: #{tpu_custom_call.1} parent=1 // pred_check
      _
    $region19: #{tpu_custom_call.1} parent=1 // pred_check_branch
      %41 = sbr.rel (0) target = $region21
    $region20: #{tpu_custom_call.1} parent=1 // pred_region
      %42 = dma.done [#allocation6], 1024
    $region21: #{tpu_custom_call.1} parent=1 // pred_fallthru
      _
    %v44 = vld [vmem:[#allocation2] sm:$0xf]
    %v45 = vld [vmem:[#allocation2 + $0x4] sm:$0xf]
    %v46 = vld [vmem:[#allocation5] sm:$0xf]
    %v47 = vld [vmem:[#allocation5 + $0x4] sm:$0xf]
    %v48 = vld [vmem:[#allocation5 + $0x8] sm:$0xf]
    %v49 = vld [vmem:[#allocation5 + $0xc] sm:$0xf]
    %v50 = vld [vmem:[#allocation5 + $0x10] sm:$0xf]
    %v51 = vld [vmem:[#allocation5 + $0x14] sm:$0xf]
    %v52 = vld [vmem:[#allocation5 + $0x18] sm:$0xf]
    %v53 = vld [vmem:[#allocation5 + $0x1c] sm:$0xf]
    %v54 = vld [vmem:[#allocation5 + $0x20] sm:$0xf]
    %v55 = vld [vmem:[#allocation5 + $0x24] sm:$0xf]
    %v56 = vld [vmem:[#allocation5 + $0x28] sm:$0xf]
    %v57 = vld [vmem:[#allocation5 + $0x2c] sm:$0xf]
    %v58 = vld [vmem:[#allocation5 + $0x30] sm:$0xf]
    %v59 = vld [vmem:[#allocation5 + $0x34] sm:$0xf]
    %v60 = vld [vmem:[#allocation5 + $0x38] sm:$0xf]
    %v61 = vld [vmem:[#allocation5 + $0x3c] sm:$0xf]
    %v62 = vld [vmem:[%s2] sm:$0x1]
    %v64 = vlaneseq
    %v65 = vshrl.u32 %v64, 7
    %v66 = vsub.s32 0, %v65
    %v67 = vrot.slane %v62, %v66
    %v71 = vunpack.c.l.b16 %v44
    %v72 = vunpack.c.l.b16 %v45
    %v73 = vpack.c.b16 %v72, %v71
    %v91 = vunpack.c.l.b16 %v46
    %v92 = vunpack.c.l.b16 %v47
    %v93 = vunpack.c.l.b16 %v48
    %v94 = vunpack.c.l.b16 %v49
    %v95 = vunpack.c.l.b16 %v50
    %v96 = vunpack.c.l.b16 %v51
    %v97 = vunpack.c.l.b16 %v52
    %v98 = vunpack.c.l.b16 %v53
    %v99 = vunpack.c.l.b16 %v54
    %v100 = vunpack.c.l.b16 %v55
    %v101 = vunpack.c.l.b16 %v56
    %v102 = vunpack.c.l.b16 %v57
    %v103 = vunpack.c.l.b16 %v58
    %v104 = vunpack.c.l.b16 %v59
    %v105 = vunpack.c.l.b16 %v60
    %v106 = vunpack.c.l.b16 %v61
    %v107 = vpack.c.b16 %v92, %v91
    %v108 = vpack.c.b16 %v94, %v93
    %v109 = vpack.c.b16 %v96, %v95
    %v110 = vpack.c.b16 %v98, %v97
    %v111 = vpack.c.b16 %v100, %v99
    %v112 = vpack.c.b16 %v102, %v101
    %v113 = vpack.c.b16 %v104, %v103
    %v114 = vpack.c.b16 %v106, %v105
    %123 = vmatprep.subr.bf16.mxu0 0
    %124 = vmatpush1.bf16.msra.mxu0 %v114
    %125 = vmatprep.subr.bf16.mxu0 0
    %126 = vmatpush1.bf16.msra.mxu0 %v113
    %127 = vmatprep.subr.bf16.mxu0 0
    %128 = vmatpush1.bf16.msra.mxu0 %v112
    %129 = vmatprep.subr.bf16.mxu0 0
    %130 = vmatpush1.bf16.msra.mxu0 %v111
    %131 = vmatprep.subr.bf16.mxu0 0
    %132 = vmatpush1.bf16.msra.mxu0 %v110
    %133 = vmatprep.subr.bf16.mxu0 0
    %134 = vmatpush1.bf16.msra.mxu0 %v109
    %135 = vmatprep.subr.bf16.mxu0 0
    %136 = vmatpush1.bf16.msra.mxu0 %v108
    %137 = vmatprep.subr.bf16.mxu0 0
    %138 = vmatpush1.bf16.msra.mxu0 %v107
    %139 = vmatprep.subr.bf16.mxu0 0
    %140 = vmatpush2.bf16.msra.mxu0 0
    %141 = vmatprep.subr.bf16.mxu0 0
    %142 = vmatpush2.bf16.msra.mxu0 0
    %143 = vmatprep.subr.bf16.mxu0 0
    %144 = vmatpush2.bf16.msra.mxu0 0
    %145 = vmatprep.subr.bf16.mxu0 0
    %146 = vmatpush2.bf16.msra.mxu0 0
    %147 = vmatprep.subr.bf16.mxu0 0
    %148 = vmatpush2.bf16.msra.mxu0 0
    %149 = vmatprep.subr.bf16.mxu0 0
    %150 = vmatpush2.bf16.msra.mxu0 0
    %151 = vmatprep.subr.bf16.mxu0 0
    %152 = vmatpush2.bf16.msra.mxu0 0
    %153 = vmatprep.subr.bf16.mxu0 0
    %154 = vmatpush2.bf16.msra.mxu0 0
    %155 = vmatprep.mubr.bf16.mxu0 0
    %156 = vmatmul.mubr.bf16.gmra.mxu0 %v73
    %v157 = vpop.f32.mrf.mxu0
    %v158 = vadd.f32 %v67, %v157
    %v159 = vpop.f32.mrf.mxu0
    %v160 = vpop.f32.mrf.mxu0
    %v161 = vadd.f32 %v67, %v160
    %v162 = vpop.f32.mrf.mxu0
    %163 = vdwg.mxu0
    %v164 = vtanh.pop %v158
    %v165 = vtanh.pop %v161
    %166 = vst [vmem:[#allocation7] sm:$0xff] %v164
    %167 = vst [vmem:[#allocation7 + $0x8] sm:$0xff] %v165
    // Predicated region
    $region22: #{tpu_custom_call.1} parent=1 // pred_check
      _
    $region23: #{tpu_custom_call.1} parent=1 // pred_check_branch
      %169 = sbr.rel (0) target = $region25
    $region24: #{tpu_custom_call.1} parent=1 // pred_region
      %s171 = ssub.s32 256, 256
      %172 = vsyncadd [#allocation4], %s171
      %s173 = sshll.u32 [#allocation7], 4
      %s174 = int_to_ptr.vmem [resolvable:$true] %s173
      %179 = dma.vmem_to_hbm [thread:$0]  %s174, 256, %s3, [#allocation4], 128, 128, 8
    $region25: #{tpu_custom_call.1} parent=1 // pred_fallthru
      _
    // Predicated region
    $region26: #{tpu_custom_call.1} parent=1 // pred_check
      _
    $region27: #{tpu_custom_call.1} parent=1 // pred_check_branch
      %181 = sbr.rel (0) target = $region29
    $region28: #{tpu_custom_call.1} parent=1 // pred_region
      %182 = dma.done [#allocation4], 256
    $region29: #{tpu_custom_call.1} parent=1 // pred_fallthru
      _
    %183 = vsyncpa [#allocation3], 1
    %184 = vsyncpa [#allocation6], 1
    %185 = vsyncpa [#allocation4], 1

</llo_original>
